<compile_context>
chip_gen: v6e
topology: v6e:2x2x1
jax: 0.10.0
libtpu: 0.0.40
codegen_flags: <defaults>
</compile_context>

<pallas_src>
import functools
import math

import jax
import jax.numpy as jnp
from jax import lax
from jax.experimental import pallas as pl
from jax.experimental.pallas import tpu as pltpu

_EPS = 1e-5
_TWO_PI_ISH = 6.28  # matches torch.tensor(2 * 3.14)


def _cal_gamma(v: float) -> float:
    # scipy.special.gamma equivalent for positive scalar v
    a = math.gamma((v + 1.0) / 2.0)
    b = math.sqrt(v * math.pi) * math.gamma(v / 2.0)
    return a / b


def _round_up(x: int, m: int) -> int:
    return ((x + m - 1) // m) * m


def _cdiv(a: int, b: int) -> int:
    return -(-a // b)


def _recip(x):
    # Approximate vrcp (single EUP push) + one Newton step on the VPU
    # (~1e-7 relative error), instead of an exact multi-op f32 divide.
    r = pl.reciprocal(x, approx=True)
    return r * (jnp.float32(2.0) - x * r)


def _ipow(r, n: int):
    # r**n for a static positive integer n via square-and-multiply (VPU only).
    out = None
    base = r
    while n:
        if n & 1:
            out = base if out is None else out * base
        n >>= 1
        if n:
            base = base * base
    return out


def _sim(d, gamma, v):
    # gamma^2 * 6.28 * (1 + d/v)^-(v+1)
    c = jnp.float32(gamma * gamma * _TWO_PI_ISH)
    p = float(v) + 1.0
    if p.is_integer() and 1.0 <= p <= 1024.0:
        # Integer exponent: reciprocal first (r <= 1, powers underflow to 0
        # gracefully), then square-and-multiply on the VPU. For v=100 that is
        # 1 EUP push + ~12 vmuls instead of log1p+exp on the EUP.
        r = _recip(1.0 + d * jnp.float32(1.0 / v))
        return c * _ipow(r, int(p))
    # Generic (non-integer / huge v) fallback.
    return c * jnp.exp(jnp.float32(-p) * jnp.log1p(d * jnp.float32(1.0 / v)))


def _ce(P, Q):
    # -(P*log(Q+eps) + (1-P)*log(1-Q+eps)) == -(P*(logQ - log1mQ) + log1mQ)
    logQ = jnp.log(Q + jnp.float32(_EPS))
    log1mQ = jnp.log(1.0 - Q + jnp.float32(_EPS))
    return -(P * (logQ - log1mQ) + log1mQ)


def _myloss_kernel(xx_tp_ref, x_tp_ref, x1t_ref, x2t_ref, yy1_ref, yy2_ref,
                   zz_tp_ref, z_tp_ref, z1t_ref, z2t_ref, zz1_ref, zz2_ref,
                   rmask_ref, cmask_ref, out_ref, acc_ref, *,
                   gamma_in, v_in, gamma_lat, v_lat, d_lat, needs_mask):
    j = pl.program_id(1)

    @pl.when(j == 0)
    def _init():
        acc_ref[...] = jnp.zeros_like(acc_ref)

    nn_contract = (((1,), (0,)), ((), ()))  # plain NN matmul

    x_tp = x_tp_ref[...]          # (TM, D_in)
    xx_tp = xx_tp_ref[...]        # (TM, 1)
    z_tp = z_tp_ref[...]          # (TM, D_lat)

    def sqdist_data(xt_ref, yy_ref):
        ab = lax.dot_general(x_tp, xt_ref[...], nn_contract,
                             preferred_element_type=jnp.float32)   # (TM, TN)
        d = xx_tp + yy_ref[...] - 2.0 * ab
        return jnp.maximum(d, jnp.float32(1e-12))                  # clamp(min=1e-12)

    def sqdist_latent(zt_ref, zz_ref):
        zt = zt_ref[...]          # (D_lat, TN)
        if d_lat <= 8:
            # Tiny K: pure VPU broadcast path, no MXU push/drain.
            d = None
            for k in range(d_lat):
                diff = z_tp[:, k:k + 1] - zt[k:k + 1, :]
                sq = diff * diff
                d = sq if d is None else d + sq
        else:
            d = zz_tp_ref[...] + zz_ref[...] - 2.0 * lax.dot_general(
                z_tp, zt, nn_contract, preferred_element_type=jnp.float32)
        return jnp.maximum(d, jnp.float32(1e-12))

    def accumulate(P, Q):
        l = _ce(P, Q)                                              # (TM, TN)
        if needs_mask:
            l = l * cmask_ref[...]                                 # (1, TN) bcast
        rs = jnp.sum(l, axis=1, keepdims=True)                     # (TM, 1)
        if needs_mask:
            rs = rs * rmask_ref[...]                               # (TM, 1)
        acc_ref[...] += rs

    # Term 1: CE(Sim_data_tp1, Sim_late_tp2); reduce before building term 2
    # so at most one P/Q/l triple of (TM,TN) temporaries is live at a time.
    accumulate(_sim(sqdist_data(x1t_ref, yy1_ref), gamma_in, v_in),
               _sim(sqdist_latent(z2t_ref, zz2_ref), gamma_lat, v_lat))
    # Term 2: CE(Sim_data_tp2, Sim_late_tp1)
    accumulate(_sim(sqdist_data(x2t_ref, yy2_ref), gamma_in, v_in),
               _sim(sqdist_latent(z1t_ref, zz1_ref), gamma_lat, v_lat))

    @pl.when(j == pl.num_programs(1) - 1)
    def _finalize():
        out_ref[...] = jnp.zeros_like(out_ref) + jnp.sum(acc_ref[...])


def my_loss_forward(input_data1, input_data2, latent_data1, latent_data2,
                    v_latent, input_tp, latent_tp, *, v_input=100.0,
                    tile_m=256, tile_n=256):
    gamma_in = _cal_gamma(float(v_input))
    gamma_lat = _cal_gamma(float(v_latent))

    x_tp = jnp.asarray(input_tp, jnp.float32)
    x1 = jnp.asarray(input_data1, jnp.float32)
    x2 = jnp.asarray(input_data2, jnp.float32)
    z_tp = jnp.asarray(latent_tp, jnp.float32)
    z1 = jnp.asarray(latent_data1, jnp.float32)
    z2 = jnp.asarray(latent_data2, jnp.float32)

    M, d_in = x_tp.shape
    N = x1.shape[0]
    d_lat = z_tp.shape[1]

    tm = min(int(tile_m), _round_up(M, 8))     # multiple of 8
    # v7x megacore: axis 0 is the only "parallel" axis; keep >= 2 M-tiles
    # whenever M is splittable so both TensorCores get work.
    if M > 8 and _cdiv(M, tm) < 2:
        tm = _round_up(_cdiv(M, 2), 8)
    tn = min(int(tile_n), _round_up(N, 128))   # multiple of 128
    m_pad = _round_up(M, tm)
    n_pad = _round_up(N, tn)
    needs_mask = (m_pad != M) or (n_pad != N)

    def pad_rows(a, rows):
        extra = rows - a.shape[0]
        return a if extra == 0 else jnp.pad(a, ((0, extra), (0, 0)))

    x_tp_p = pad_rows(x_tp, m_pad)
    x1_p, x2_p = pad_rows(x1, n_pad), pad_rows(x2, n_pad)
    z_tp_p = pad_rows(z_tp, m_pad)
    z1_p, z2_p = pad_rows(z1, n_pad), pad_rows(z2, n_pad)

    # Hoist per-row squared norms / transposes / tail masks out of the kernel
    # (one-time O(N*D) XLA work; avoids per-tile cross-lane work in Mosaic).
    xx_tp = jnp.sum(x_tp_p * x_tp_p, axis=1, keepdims=True)          # (Mp, 1)
    zz_tp = jnp.sum(z_tp_p * z_tp_p, axis=1, keepdims=True)          # (Mp, 1)
    yy1 = jnp.sum(x1_p * x1_p, axis=1)[None, :]                      # (1, Np)
    yy2 = jnp.sum(x2_p * x2_p, axis=1)[None, :]                      # (1, Np)
    zz1 = jnp.sum(z1_p * z1_p, axis=1)[None, :]                      # (1, Np)
    zz2 = jnp.sum(z2_p * z2_p, axis=1)[None, :]                      # (1, Np)
    x1_t, x2_t = x1_p.T, x2_p.T                                      # (D_in, Np)
    z1_t, z2_t = z1_p.T, z2_p.T                                      # (D_lat, Np)
    rmask = (jnp.arange(m_pad) < M).astype(jnp.float32)[:, None]     # (Mp, 1)
    cmask = (jnp.arange(n_pad) < N).astype(jnp.float32)[None, :]     # (1, Np)

    grid = (m_pad // tm, n_pad // tn)

    kernel = functools.partial(
        _myloss_kernel,
        gamma_in=float(gamma_in), v_in=float(v_input),
        gamma_lat=float(gamma_lat), v_lat=float(v_latent),
        d_lat=d_lat, needs_mask=needs_mask)

    cost = pl.CostEstimate(
        flops=int(4 * M * N * (d_in + d_lat) + 80 * M * N),
        transcendentals=int(8 * M * N),
        bytes_accessed=int(4 * (M * (d_in + d_lat + 3)
                                + grid[0] * N * (2 * d_in + 2 * d_lat + 5)
                                + grid[0] * 128)))

    grid_spec = pltpu.PrefetchScalarGridSpec(
        num_scalar_prefetch=0,
        grid=grid,
        in_specs=[
            pl.BlockSpec((tm, 1), lambda i, j: (i, 0)),        # xx_tp
            pl.BlockSpec((tm, d_in), lambda i, j: (i, 0)),     # x_tp
            pl.BlockSpec((d_in, tn), lambda i, j: (0, j)),     # x1^T
            pl.BlockSpec((d_in, tn), lambda i, j: (0, j)),     # x2^T
            pl.BlockSpec((1, tn), lambda i, j: (0, j)),        # yy1
            pl.BlockSpec((1, tn), lambda i, j: (0, j)),        # yy2
            pl.BlockSpec((tm, 1), lambda i, j: (i, 0)),        # zz_tp
            pl.BlockSpec((tm, d_lat), lambda i, j: (i, 0)),    # z_tp
            pl.BlockSpec((d_lat, tn), lambda i, j: (0, j)),    # z1^T
            pl.BlockSpec((d_lat, tn), lambda i, j: (0, j)),    # z2^T
            pl.BlockSpec((1, tn), lambda i, j: (0, j)),        # zz1
            pl.BlockSpec((1, tn), lambda i, j: (0, j)),        # zz2
            pl.BlockSpec((tm, 1), lambda i, j: (i, 0)),        # row mask
            pl.BlockSpec((1, tn), lambda i, j: (0, j)),        # col mask
        ],
        out_specs=pl.BlockSpec((1, 128), lambda i, j: (i, 0)),
        scratch_shapes=[pltpu.VMEM((tm, 1), jnp.float32)],
    )

    partial_sums = pl.pallas_call(
        kernel,
        out_shape=jax.ShapeDtypeStruct((grid[0], 128), jnp.float32),
        grid_spec=grid_spec,
        compiler_params=pltpu.CompilerParams(
            dimension_semantics=("parallel", "arbitrary"),
            vmem_limit_bytes=20 * 1024 * 1024),
        cost_estimate=cost,
    )(xx_tp, x_tp_p, x1_t, x2_t, yy1, yy2,
      zz_tp, z_tp_p, z1_t, z2_t, zz1, zz2, rmask, cmask)

    return jnp.sum(partial_sums[:, 0]) / jnp.float32(M * N)


def _reference_forward(input_data1, input_data2, latent_data1, latent_data2,
                       v_latent, input_tp, latent_tp, *, v_input=100.0):
    # pure-JAX reference mirroring the PyTorch module
    EPS = 1e-5

    def sqdist(x, y):
        xx = jnp.sum(x * x, 1, keepdims=True)
        yy = jnp.sum(y * y, 1, keepdims=True).T
        d = xx + yy - 2.0 * (x @ y.T)
        return jnp.maximum(d, 1e-12)

    def sim(d, gamma, v):
        d = jnp.maximum(d, 0.0)
        return gamma * (2 * 3.14) * gamma * jnp.power(1.0 + d / v, -(v + 1.0))

    def two_way(P, Q):
        return jnp.mean(-(P * jnp.log(Q + EPS) + (1 - P) * jnp.log(1 - Q + EPS)))

    g_in, g_lat = _cal_gamma(v_input), _cal_gamma(v_latent)
    P1 = sim(sqdist(input_tp, input_data1), g_in, v_input)
    P2 = sim(sqdist(input_tp, input_data2), g_in, v_input)
    Q1 = sim(sqdist(latent_tp, latent_data1), g_lat, v_latent)
    Q2 = sim(sqdist(latent_tp, latent_data2), g_lat, v_latent)
    return two_way(P1, Q2) + two_way(P2, Q1)


if __name__ == "__main__":
    key = jax.random.PRNGKey(0)
    k1, k2, k3, k4, k5, k6 = jax.random.split(key, 6)

    M, N = 8, 16          # tp samples, data samples
    D_IN, D_LAT = 32, 2   # input feature dim, latent dim
    V_INPUT = 100.0
    V_LATENT = 1.0

    input_tp = jax.random.normal(k1, (M, D_IN), jnp.float32)
    input_data1 = jax.random.normal(k2, (N, D_IN), jnp.float32)
    input_data2 = jax.random.normal(k3, (N, D_IN), jnp.float32)
    latent_tp = jax.random.normal(k4, (M, D_LAT), jnp.float32)
    latent_data1 = jax.random.normal(k5, (N, D_LAT), jnp.float32)
    latent_data2 = jax.random.normal(k6, (N, D_LAT), jnp.float32)

    loss = my_loss_forward(input_data1, input_data2, latent_data1, latent_data2,
                           V_LATENT, input_tp, latent_tp, v_input=V_INPUT)
    loss = jax.block_until_ready(loss)

    ref = _reference_forward(input_data1, input_data2, latent_data1, latent_data2,
                             V_LATENT, input_tp, latent_tp, v_input=V_INPUT)
    assert jnp.allclose(loss, ref, rtol=1e-4, atol=1e-5), (loss, ref)

    print("KERNEL_OK")
</pallas_src>

<mosaic_0001>
module attributes {stable_mosaic.version = 11 : i64} {
  func.func @_myloss_kernel(%arg0: i32, %arg1: i32, %arg2: memref<8x1xf32, #tpu.memory_space<vmem>>, %arg3: memref<8x32xf32, #tpu.memory_space<vmem>>, %arg4: memref<32x128xf32, #tpu.memory_space<vmem>>, %arg5: memref<32x128xf32, #tpu.memory_space<vmem>>, %arg6: memref<1x128xf32, #tpu.memory_space<vmem>>, %arg7: memref<1x128xf32, #tpu.memory_space<vmem>>, %arg8: memref<8x1xf32, #tpu.memory_space<vmem>>, %arg9: memref<8x2xf32, #tpu.memory_space<vmem>>, %arg10: memref<2x128xf32, #tpu.memory_space<vmem>>, %arg11: memref<2x128xf32, #tpu.memory_space<vmem>>, %arg12: memref<1x128xf32, #tpu.memory_space<vmem>>, %arg13: memref<1x128xf32, #tpu.memory_space<vmem>>, %arg14: memref<8x1xf32, #tpu.memory_space<vmem>>, %arg15: memref<1x128xf32, #tpu.memory_space<vmem>>, %arg16: memref<1x128xf32, #tpu.memory_space<vmem>>, %arg17: memref<8x1xf32, #tpu.memory_space<vmem>>) attributes {dimension_semantics = [#tpu.dimension_semantics<parallel>, #tpu.dimension_semantics<arbitrary>], iteration_bounds = array<i64: 1, 1>, scalar_prefetch = 0 : i64, scratch_operands = 1 : i64, tpu.core_type = #tpu.core_type<tc>, window_params = [{transform_indices = @transform_0, window_bounds = array<i64: 8, 1>}, {transform_indices = @transform_1, window_bounds = array<i64: 8, 32>}, {transform_indices = @transform_2, window_bounds = array<i64: 32, 128>}, {transform_indices = @transform_3, window_bounds = array<i64: 32, 128>}, {transform_indices = @transform_4, window_bounds = array<i64: 1, 128>}, {transform_indices = @transform_5, window_bounds = array<i64: 1, 128>}, {transform_indices = @transform_6, window_bounds = array<i64: 8, 1>}, {transform_indices = @transform_7, window_bounds = array<i64: 8, 2>}, {transform_indices = @transform_8, window_bounds = array<i64: 2, 128>}, {transform_indices = @transform_9, window_bounds = array<i64: 2, 128>}, {transform_indices = @transform_10, window_bounds = array<i64: 1, 128>}, {transform_indices = @transform_11, window_bounds = array<i64: 1, 128>}, {transform_indices = @transform_12, window_bounds = array<i64: 8, 1>}, {transform_indices = @transform_13, window_bounds = array<i64: 1, 128>}, {transform_indices = @transform_14, window_bounds = array<i64: 1, 128>}]} {
    %c0_i32 = arith.constant 0 : i32
    %0 = arith.cmpi eq, %arg1, %c0_i32 : i32
    %1 = arith.extui %0 : i1 to i32
    %c0_i32_0 = arith.constant 0 : i32
    %2 = arith.cmpi ne, %1, %c0_i32_0 : i32
    scf.if %2 {
      %cst_69 = arith.constant 0.000000e+00 : f32
      %173 = vector.broadcast %cst_69 : f32 to vector<8x1xf32>
      %c0_70 = arith.constant 0 : index
      %c0_71 = arith.constant 0 : index
      %174 = vector.load %arg17[%c0_70, %c0_71] : memref<8x1xf32, #tpu.memory_space<vmem>>, vector<8x1xf32>
      tpu.vector_store %arg17[%c0_70, %c0_71], %173 {strides = array<i32>} : memref<8x1xf32, #tpu.memory_space<vmem>>, vector<8x1xf32>,
    } else {
    }
    %c0 = arith.constant 0 : index
    %c0_1 = arith.constant 0 : index
    %3 = vector.load %arg3[%c0, %c0_1] : memref<8x32xf32, #tpu.memory_space<vmem>>, vector<8x32xf32>
    %c0_2 = arith.constant 0 : index
    %c0_3 = arith.constant 0 : index
    %4 = vector.load %arg2[%c0_2, %c0_3] : memref<8x1xf32, #tpu.memory_space<vmem>>, vector<8x1xf32>
    %c0_4 = arith.constant 0 : index
    %c0_5 = arith.constant 0 : index
    %5 = vector.load %arg9[%c0_4, %c0_5] : memref<8x2xf32, #tpu.memory_space<vmem>>, vector<8x2xf32>
    %c0_6 = arith.constant 0 : index
    %c0_7 = arith.constant 0 : index
    %6 = vector.load %arg4[%c0_6, %c0_7] : memref<32x128xf32, #tpu.memory_space<vmem>>, vector<32x128xf32>
    %cst = arith.constant dense<0.000000e+00> : vector<8x128xf32>
    %7 = tpu.matmul %3, %6, %cst {dimension_numbers = #tpu.dot_dimension_numbers<[1], [0], [0], [1], [0, 0, 1, 1], [], []>} : vector<8x32xf32>, vector<32x128xf32>, vector<8x128xf32> -> vector<8x128xf32>
    %c0_8 = arith.constant 0 : index
    %c0_9 = arith.constant 0 : index
    %8 = vector.load %arg6[%c0_8, %c0_9] : memref<1x128xf32, #tpu.memory_space<vmem>>, vector<1x128xf32>
    %9 = vector.broadcast %4 : vector<8x1xf32> to vector<8x128xf32>
    %10 = vector.broadcast %8 : vector<1x128xf32> to vector<8x128xf32>
    %11 = arith.addf %9, %10 : vector<8x128xf32>
    %cst_10 = arith.constant 2.000000e+00 : f32
    %12 = vector.broadcast %cst_10 : f32 to vector<8x128xf32>
    %13 = arith.mulf %12, %7 : vector<8x128xf32>
    %14 = arith.subf %11, %13 : vector<8x128xf32>
    %cst_11 = arith.constant 9.99999996E-13 : f32
    %15 = vector.broadcast %cst_11 : f32 to vector<8x128xf32>
    %16 = arith.maximumf %14, %15 : vector<8x128xf32>
    %cst_12 = arith.constant 0.00999999977 : f32
    %17 = vector.broadcast %cst_12 : f32 to vector<8x128xf32>
    %18 = arith.mulf %16, %17 : vector<8x128xf32>
    %cst_13 = arith.constant 1.000000e+00 : f32
    %19 = vector.broadcast %cst_13 : f32 to vector<8x128xf32>
    %20 = arith.addf %19, %18 : vector<8x128xf32>
    %21 = tpu.reciprocal %20 {approx = true} : vector<8x128xf32> -> vector<8x128xf32>
    %22 = arith.mulf %20, %21 : vector<8x128xf32>
    %cst_14 = arith.constant 2.000000e+00 : f32
    %23 = vector.broadcast %cst_14 : f32 to vector<8x128xf32>
    %24 = arith.subf %23, %22 : vector<8x128xf32>
    %25 = arith.mulf %21, %24 : vector<8x128xf32>
    %26 = arith.mulf %25, %25 : vector<8x128xf32>
    %27 = arith.mulf %26, %26 : vector<8x128xf32>
    %28 = arith.mulf %25, %27 : vector<8x128xf32>
    %29 = arith.mulf %27, %27 : vector<8x128xf32>
    %30 = arith.mulf %29, %29 : vector<8x128xf32>
    %31 = arith.mulf %30, %30 : vector<8x128xf32>
    %32 = arith.mulf %28, %31 : vector<8x128xf32>
    %33 = arith.mulf %31, %31 : vector<8x128xf32>
    %34 = arith.mulf %32, %33 : vector<8x128xf32>
    %cst_15 = arith.constant 0.994508147 : f32
    %35 = vector.broadcast %cst_15 : f32 to vector<8x128xf32>
    %36 = arith.mulf %35, %34 : vector<8x128xf32>
    %c0_16 = arith.constant 0 : index
    %c0_17 = arith.constant 0 : index
    %37 = vector.load %arg11[%c0_16, %c0_17] : memref<2x128xf32, #tpu.memory_space<vmem>>, vector<2x128xf32>
    %38 = vector.extract_strided_slice %5 {offsets = [0, 0], sizes = [8, 1], strides = [1, 1]} : vector<8x2xf32> to vector<8x1xf32>
    %39 = vector.extract_strided_slice %37 {offsets = [0, 0], sizes = [1, 128], strides = [1, 1]} : vector<2x128xf32> to vector<1x128xf32>
    %40 = vector.broadcast %38 : vector<8x1xf32> to vector<8x128xf32>
    %41 = vector.broadcast %39 : vector<1x128xf32> to vector<8x128xf32>
    %42 = arith.subf %40, %41 : vector<8x128xf32>
    %43 = arith.mulf %42, %42 : vector<8x128xf32>
    %44 = vector.extract_strided_slice %5 {offsets = [0, 1], sizes = [8, 1], strides = [1, 1]} : vector<8x2xf32> to vector<8x1xf32>
    %45 = vector.extract_strided_slice %37 {offsets = [1, 0], sizes = [1, 128], strides = [1, 1]} : vector<2x128xf32> to vector<1x128xf32>
    %46 = vector.broadcast %44 : vector<8x1xf32> to vector<8x128xf32>
    %47 = vector.broadcast %45 : vector<1x128xf32> to vector<8x128xf32>
    %48 = arith.subf %46, %47 : vector<8x128xf32>
    %49 = arith.mulf %48, %48 : vector<8x128xf32>
    %50 = arith.addf %43, %49 : vector<8x128xf32>
    %cst_18 = arith.constant 9.99999996E-13 : f32
    %51 = vector.broadcast %cst_18 : f32 to vector<8x128xf32>
    %52 = arith.maximumf %50, %51 : vector<8x128xf32>
    %cst_19 = arith.constant 1.000000e+00 : f32
    %53 = vector.broadcast %cst_19 : f32 to vector<8x128xf32>
    %54 = arith.mulf %52, %53 : vector<8x128xf32>
    %cst_20 = arith.constant 1.000000e+00 : f32
    %55 = vector.broadcast %cst_20 : f32 to vector<8x128xf32>
    %56 = arith.addf %55, %54 : vector<8x128xf32>
    %57 = tpu.reciprocal %56 {approx = true} : vector<8x128xf32> -> vector<8x128xf32>
    %58 = arith.mulf %56, %57 : vector<8x128xf32>
    %cst_21 = arith.constant 2.000000e+00 : f32
    %59 = vector.broadcast %cst_21 : f32 to vector<8x128xf32>
    %60 = arith.subf %59, %58 : vector<8x128xf32>
    %61 = arith.mulf %57, %60 : vector<8x128xf32>
    %62 = arith.mulf %61, %61 : vector<8x128xf32>
    %cst_22 = arith.constant 0.636297047 : f32
    %63 = vector.broadcast %cst_22 : f32 to vector<8x128xf32>
    %64 = arith.mulf %63, %62 : vector<8x128xf32>
    %cst_23 = arith.constant 9.99999974E-6 : f32
    %65 = vector.broadcast %cst_23 : f32 to vector<8x128xf32>
    %66 = arith.addf %64, %65 : vector<8x128xf32>
    %67 = math.log %66 : vector<8x128xf32>
    %cst_24 = arith.constant 1.000000e+00 : f32
    %68 = vector.broadcast %cst_24 : f32 to vector<8x128xf32>
    %69 = arith.subf %68, %64 : vector<8x128xf32>
    %cst_25 = arith.constant 9.99999974E-6 : f32
    %70 = vector.broadcast %cst_25 : f32 to vector<8x128xf32>
    %71 = arith.addf %69, %70 : vector<8x128xf32>
    %72 = math.log %71 : vector<8x128xf32>
    %73 = arith.subf %67, %72 : vector<8x128xf32>
    %74 = arith.mulf %36, %73 : vector<8x128xf32>
    %75 = arith.addf %74, %72 : vector<8x128xf32>
    %cst_26 = arith.constant 0.000000e+00 : f32
    %76 = vector.broadcast %cst_26 : f32 to vector<8x128xf32>
    %77 = arith.subf %76, %75 : vector<8x128xf32>
    %c0_27 = arith.constant 0 : index
    %c0_28 = arith.constant 0 : index
    %78 = vector.load %arg15[%c0_27, %c0_28] : memref<1x128xf32, #tpu.memory_space<vmem>>, vector<1x128xf32>
    %79 = vector.broadcast %78 : vector<1x128xf32> to vector<8x128xf32>
    %80 = arith.mulf %77, %79 : vector<8x128xf32>
    %cst_29 = arith.constant dense<0.000000e+00> : vector<8xf32>
    %81 = vector.multi_reduction <add>, %80, %cst_29 [1] : vector<8x128xf32> to vector<8xf32>
    %82 = vector.shape_cast %81 : vector<8xf32> to vector<8x1xf32>
    %c0_30 = arith.constant 0 : index
    %c0_31 = arith.constant 0 : index
    %83 = vector.load %arg14[%c0_30, %c0_31] : memref<8x1xf32, #tpu.memory_space<vmem>>, vector<8x1xf32>
    %84 = arith.mulf %82, %83 : vector<8x1xf32>
    %c0_32 = arith.constant 0 : index
    %c0_33 = arith.constant 0 : index
    %85 = vector.load %arg17[%c0_32, %c0_33] : memref<8x1xf32, #tpu.memory_space<vmem>>, vector<8x1xf32>
    %86 = arith.addf %85, %84 : vector<8x1xf32>
    %c0_34 = arith.constant 0 : index
    %c0_35 = arith.constant 0 : index
    %87 = vector.load %arg17[%c0_34, %c0_35] : memref<8x1xf32, #tpu.memory_space<vmem>>, vector<8x1xf32>
    tpu.vector_store %arg17[%c0_34, %c0_35], %86 {strides = array<i32>} : memref<8x1xf32, #tpu.memory_space<vmem>>, vector<8x1xf32>,
    %c0_36 = arith.constant 0 : index
    %c0_37 = arith.constant 0 : index
    %88 = vector.load %arg5[%c0_36, %c0_37] : memref<32x128xf32, #tpu.memory_space<vmem>>, vector<32x128xf32>
    %cst_38 = arith.constant dense<0.000000e+00> : vector<8x128xf32>
    %89 = tpu.matmul %3, %88, %cst_38 {dimension_numbers = #tpu.dot_dimension_numbers<[1], [0], [0], [1], [0, 0, 1, 1], [], []>} : vector<8x32xf32>, vector<32x128xf32>, vector<8x128xf32> -> vector<8x128xf32>
    %c0_39 = arith.constant 0 : index
    %c0_40 = arith.constant 0 : index
    %90 = vector.load %arg7[%c0_39, %c0_40] : memref<1x128xf32, #tpu.memory_space<vmem>>, vector<1x128xf32>
    %91 = vector.broadcast %4 : vector<8x1xf32> to vector<8x128xf32>
    %92 = vector.broadcast %90 : vector<1x128xf32> to vector<8x128xf32>
    %93 = arith.addf %91, %92 : vector<8x128xf32>
    %cst_41 = arith.constant 2.000000e+00 : f32
    %94 = vector.broadcast %cst_41 : f32 to vector<8x128xf32>
    %95 = arith.mulf %94, %89 : vector<8x128xf32>
    %96 = arith.subf %93, %95 : vector<8x128xf32>
    %cst_42 = arith.constant 9.99999996E-13 : f32
    %97 = vector.broadcast %cst_42 : f32 to vector<8x128xf32>
    %98 = arith.maximumf %96, %97 : vector<8x128xf32>
    %cst_43 = arith.constant 0.00999999977 : f32
    %99 = vector.broadcast %cst_43 : f32 to vector<8x128xf32>
    %100 = arith.mulf %98, %99 : vector<8x128xf32>
    %cst_44 = arith.constant 1.000000e+00 : f32
    %101 = vector.broadcast %cst_44 : f32 to vector<8x128xf32>
    %102 = arith.addf %101, %100 : vector<8x128xf32>
    %103 = tpu.reciprocal %102 {approx = true} : vector<8x128xf32> -> vector<8x128xf32>
    %104 = arith.mulf %102, %103 : vector<8x128xf32>
    %cst_45 = arith.constant 2.000000e+00 : f32
    %105 = vector.broadcast %cst_45 : f32 to vector<8x128xf32>
    %106 = arith.subf %105, %104 : vector<8x128xf32>
    %107 = arith.mulf %103, %106 : vector<8x128xf32>
    %108 = arith.mulf %107, %107 : vector<8x128xf32>
    %109 = arith.mulf %108, %108 : vector<8x128xf32>
    %110 = arith.mulf %107, %109 : vector<8x128xf32>
    %111 = arith.mulf %109, %109 : vector<8x128xf32>
    %112 = arith.mulf %111, %111 : vector<8x128xf32>
    %113 = arith.mulf %112, %112 : vector<8x128xf32>
    %114 = arith.mulf %110, %113 : vector<8x128xf32>
    %115 = arith.mulf %113, %113 : vector<8x128xf32>
    %116 = arith.mulf %114, %115 : vector<8x128xf32>
    %cst_46 = arith.constant 0.994508147 : f32
    %117 = vector.broadcast %cst_46 : f32 to vector<8x128xf32>
    %118 = arith.mulf %117, %116 : vector<8x128xf32>
    %c0_47 = arith.constant 0 : index
    %c0_48 = arith.constant 0 : index
    %119 = vector.load %arg10[%c0_47, %c0_48] : memref<2x128xf32, #tpu.memory_space<vmem>>, vector<2x128xf32>
    %120 = vector.extract_strided_slice %5 {offsets = [0, 0], sizes = [8, 1], strides = [1, 1]} : vector<8x2xf32> to vector<8x1xf32>
    %121 = vector.extract_strided_slice %119 {offsets = [0, 0], sizes = [1, 128], strides = [1, 1]} : vector<2x128xf32> to vector<1x128xf32>
    %122 = vector.broadcast %120 : vector<8x1xf32> to vector<8x128xf32>
    %123 = vector.broadcast %121 : vector<1x128xf32> to vector<8x128xf32>
    %124 = arith.subf %122, %123 : vector<8x128xf32>
    %125 = arith.mulf %124, %124 : vector<8x128xf32>
    %126 = vector.extract_strided_slice %5 {offsets = [0, 1], sizes = [8, 1], strides = [1, 1]} : vector<8x2xf32> to vector<8x1xf32>
    %127 = vector.extract_strided_slice %119 {offsets = [1, 0], sizes = [1, 128], strides = [1, 1]} : vector<2x128xf32> to vector<1x128xf32>
    %128 = vector.broadcast %126 : vector<8x1xf32> to vector<8x128xf32>
    %129 = vector.broadcast %127 : vector<1x128xf32> to vector<8x128xf32>
    %130 = arith.subf %128, %129 : vector<8x128xf32>
    %131 = arith.mulf %130, %130 : vector<8x128xf32>
    %132 = arith.addf %125, %131 : vector<8x128xf32>
    %cst_49 = arith.constant 9.99999996E-13 : f32
    %133 = vector.broadcast %cst_49 : f32 to vector<8x128xf32>
    %134 = arith.maximumf %132, %133 : vector<8x128xf32>
    %cst_50 = arith.constant 1.000000e+00 : f32
    %135 = vector.broadcast %cst_50 : f32 to vector<8x128xf32>
    %136 = arith.mulf %134, %135 : vector<8x128xf32>
    %cst_51 = arith.constant 1.000000e+00 : f32
    %137 = vector.broadcast %cst_51 : f32 to vector<8x128xf32>
    %138 = arith.addf %137, %136 : vector<8x128xf32>
    %139 = tpu.reciprocal %138 {approx = true} : vector<8x128xf32> -> vector<8x128xf32>
    %140 = arith.mulf %138, %139 : vector<8x128xf32>
    %cst_52 = arith.constant 2.000000e+00 : f32
    %141 = vector.broadcast %cst_52 : f32 to vector<8x128xf32>
    %142 = arith.subf %141, %140 : vector<8x128xf32>
    %143 = arith.mulf %139, %142 : vector<8x128xf32>
    %144 = arith.mulf %143, %143 : vector<8x128xf32>
    %cst_53 = arith.constant 0.636297047 : f32
    %145 = vector.broadcast %cst_53 : f32 to vector<8x128xf32>
    %146 = arith.mulf %145, %144 : vector<8x128xf32>
    %cst_54 = arith.constant 9.99999974E-6 : f32
    %147 = vector.broadcast %cst_54 : f32 to vector<8x128xf32>
    %148 = arith.addf %146, %147 : vector<8x128xf32>
    %149 = math.log %148 : vector<8x128xf32>
    %cst_55 = arith.constant 1.000000e+00 : f32
    %150 = vector.broadcast %cst_55 : f32 to vector<8x128xf32>
    %151 = arith.subf %150, %146 : vector<8x128xf32>
    %cst_56 = arith.constant 9.99999974E-6 : f32
    %152 = vector.broadcast %cst_56 : f32 to vector<8x128xf32>
    %153 = arith.addf %151, %152 : vector<8x128xf32>
    %154 = math.log %153 : vector<8x128xf32>
    %155 = arith.subf %149, %154 : vector<8x128xf32>
    %156 = arith.mulf %118, %155 : vector<8x128xf32>
    %157 = arith.addf %156, %154 : vector<8x128xf32>
    %cst_57 = arith.constant 0.000000e+00 : f32
    %158 = vector.broadcast %cst_57 : f32 to vector<8x128xf32>
    %159 = arith.subf %158, %157 : vector<8x128xf32>
    %c0_58 = arith.constant 0 : index
    %c0_59 = arith.constant 0 : index
    %160 = vector.load %arg15[%c0_58, %c0_59] : memref<1x128xf32, #tpu.memory_space<vmem>>, vector<1x128xf32>
    %161 = vector.broadcast %160 : vector<1x128xf32> to vector<8x128xf32>
    %162 = arith.mulf %159, %161 : vector<8x128xf32>
    %cst_60 = arith.constant dense<0.000000e+00> : vector<8xf32>
    %163 = vector.multi_reduction <add>, %162, %cst_60 [1] : vector<8x128xf32> to vector<8xf32>
    %164 = vector.shape_cast %163 : vector<8xf32> to vector<8x1xf32>
    %c0_61 = arith.constant 0 : index
    %c0_62 = arith.constant 0 : index
    %165 = vector.load %arg14[%c0_61, %c0_62] : memref<8x1xf32, #tpu.memory_space<vmem>>, vector<8x1xf32>
    %166 = arith.mulf %164, %165 : vector<8x1xf32>
    %c0_63 = arith.constant 0 : index
    %c0_64 = arith.constant 0 : index
    %167 = vector.load %arg17[%c0_63, %c0_64] : memref<8x1xf32, #tpu.memory_space<vmem>>, vector<8x1xf32>
    %168 = arith.addf %167, %166 : vector<8x1xf32>
    %c0_65 = arith.constant 0 : index
    %c0_66 = arith.constant 0 : index
    %169 = vector.load %arg17[%c0_65, %c0_66] : memref<8x1xf32, #tpu.memory_space<vmem>>, vector<8x1xf32>
    tpu.vector_store %arg17[%c0_65, %c0_66], %168 {strides = array<i32>} : memref<8x1xf32, #tpu.memory_space<vmem>>, vector<8x1xf32>,
    %c0_i32_67 = arith.constant 0 : i32
    %170 = arith.cmpi eq, %arg1, %c0_i32_67 : i32
    %171 = arith.extui %170 : i1 to i32
    %c0_i32_68 = arith.constant 0 : i32
    %172 = arith.cmpi ne, %171, %c0_i32_68 : i32
    scf.if %172 {
      %cst_69 = arith.constant 0.000000e+00 : f32
      %173 = vector.broadcast %cst_69 : f32 to vector<1x128xf32>
      %c0_70 = arith.constant 0 : index
      %c0_71 = arith.constant 0 : index
      %174 = vector.load %arg17[%c0_70, %c0_71] : memref<8x1xf32, #tpu.memory_space<vmem>>, vector<8x1xf32>
      %175 = vector.shape_cast %174 : vector<8x1xf32> to vector<1x8x1xf32>
      %cst_72 = arith.constant dense<0.000000e+00> : vector<1xf32>
      %176 = vector.multi_reduction <add>, %175, %cst_72 [1, 2] : vector<1x8x1xf32> to vector<1xf32>
      %177 = vector.shape_cast %176 : vector<1xf32> to vector<1x1x1xf32>
      %178 = vector.extract %177[0, 0, 0] : f32 from vector<1x1x1xf32>
      %179 = vector.broadcast %178 : f32 to vector<1x128xf32>
      %180 = arith.addf %173, %179 : vector<1x128xf32>
      %c0_73 = arith.constant 0 : index
      %c0_74 = arith.constant 0 : index
      %181 = vector.load %arg16[%c0_73, %c0_74] : memref<1x128xf32, #tpu.memory_space<vmem>>, vector<1x128xf32>
      tpu.vector_store %arg16[%c0_73, %c0_74], %180 {strides = array<i32>} : memref<1x128xf32, #tpu.memory_space<vmem>>, vector<1x128xf32>,
    } else {
    }
    return
  }
  func.func @transform_0(%arg0: i32, %arg1: i32) -> (i32, i32) {
    %c0_i32 = arith.constant 0 : i32
    %c0_i32_0 = arith.constant 0 : i32
    return %arg0, %c0_i32 : i32, i32
  }
  func.func @transform_1(%arg0: i32, %arg1: i32) -> (i32, i32) {
    %c0_i32 = arith.constant 0 : i32
    %c0_i32_0 = arith.constant 0 : i32
    return %arg0, %c0_i32 : i32, i32
  }
  func.func @transform_2(%arg0: i32, %arg1: i32) -> (i32, i32) {
    %c0_i32 = arith.constant 0 : i32
    %c0_i32_0 = arith.constant 0 : i32
    return %c0_i32, %arg1 : i32, i32
  }
  func.func @transform_3(%arg0: i32, %arg1: i32) -> (i32, i32) {
    %c0_i32 = arith.constant 0 : i32
    %c0_i32_0 = arith.constant 0 : i32
    return %c0_i32, %arg1 : i32, i32
  }
  func.func @transform_4(%arg0: i32, %arg1: i32) -> (i32, i32) {
    %c0_i32 = arith.constant 0 : i32
    %c0_i32_0 = arith.constant 0 : i32
    return %c0_i32, %arg1 : i32, i32
  }
  func.func @transform_5(%arg0: i32, %arg1: i32) -> (i32, i32) {
    %c0_i32 = arith.constant 0 : i32
    %c0_i32_0 = arith.constant 0 : i32
    return %c0_i32, %arg1 : i32, i32
  }
  func.func @transform_6(%arg0: i32, %arg1: i32) -> (i32, i32) {
    %c0_i32 = arith.constant 0 : i32
    %c0_i32_0 = arith.constant 0 : i32
    return %arg0, %c0_i32 : i32, i32
  }
  func.func @transform_7(%arg0: i32, %arg1: i32) -> (i32, i32) {
    %c0_i32 = arith.constant 0 : i32
    %c0_i32_0 = arith.constant 0 : i32
    return %arg0, %c0_i32 : i32, i32
  }
  func.func @transform_8(%arg0: i32, %arg1: i32) -> (i32, i32) {
    %c0_i32 = arith.constant 0 : i32
    %c0_i32_0 = arith.constant 0 : i32
    return %c0_i32, %arg1 : i32, i32
  }
  func.func @transform_9(%arg0: i32, %arg1: i32) -> (i32, i32) {
    %c0_i32 = arith.constant 0 : i32
    %c0_i32_0 = arith.constant 0 : i32
    return %c0_i32, %arg1 : i32, i32
  }
  func.func @transform_10(%arg0: i32, %arg1: i32) -> (i32, i32) {
    %c0_i32 = arith.constant 0 : i32
    %c0_i32_0 = arith.constant 0 : i32
    return %c0_i32, %arg1 : i32, i32
  }
  func.func @transform_11(%arg0: i32, %arg1: i32) -> (i32, i32) {
    %c0_i32 = arith.constant 0 : i32
    %c0_i32_0 = arith.constant 0 : i32
    return %c0_i32, %arg1 : i32, i32
  }
  func.func @transform_12(%arg0: i32, %arg1: i32) -> (i32, i32) {
    %c0_i32 = arith.constant 0 : i32
    %c0_i32_0 = arith.constant 0 : i32
    return %arg0, %c0_i32 : i32, i32
  }
  func.func @transform_13(%arg0: i32, %arg1: i32) -> (i32, i32) {
    %c0_i32 = arith.constant 0 : i32
    %c0_i32_0 = arith.constant 0 : i32
    return %c0_i32, %arg1 : i32, i32
  }
  func.func @transform_14(%arg0: i32, %arg1: i32) -> (i32, i32) {
    %c0_i32 = arith.constant 0 : i32
    %c0_i32_0 = arith.constant 0 : i32
    return %arg0, %c0_i32 : i32, i32
  }
}

</mosaic_0001>

<llo_original>
// kernel: tpu_custom_call.1
$region0: #{tpu_custom_call.1}
  #allocation0 [shape = 'u32[]', space=smem, size = 0x4, offset = 0x4, fixed_abs, tag = 'smem constant byte address 0x4 - core index']
  #allocation1 [shape = 'u32[144,128]{1,0:T(1,128)}', space=vmem, size = 0x12000, scoped, tag = 'internal scratch']
  #allocation2 [shape = 'f32[8,1]{1,0:T(8,128)}', space=vmem, size = 0x1000, scoped, tag = 'scratch operand']
  %s0 = inlined_call_operand.vmem [shape: f32[8,1], index: 0, kind: input, shape index: {}]
  %s1 = inlined_call_operand.vmem [shape: f32[8,32], index: 1, kind: input, shape index: {}]
  %s2 = inlined_call_operand.vmem [shape: f32[32,128], index: 2, kind: input, shape index: {}]
  %s3 = inlined_call_operand.hbm [shape: f32[32,128], index: 3, kind: input, shape index: {}]
  %s4 = inlined_call_operand.hbm [shape: f32[1,128], index: 4, kind: input, shape index: {}]
  %s5 = inlined_call_operand.hbm [shape: f32[1,128], index: 5, kind: input, shape index: {}]
  %s6 = inlined_call_operand.vmem [shape: f32[8,1], index: 6, kind: input, shape index: {}]
  %s7 = inlined_call_operand.vmem [shape: f32[8,2], index: 7, kind: input, shape index: {}]
  %s8 = inlined_call_operand.vmem [shape: f32[2,128], index: 8, kind: input, shape index: {}]
  %s9 = inlined_call_operand.vmem [shape: f32[2,128], index: 9, kind: input, shape index: {}]
  %s10 = inlined_call_operand.vmem [shape: f32[1,128], index: 10, kind: input, shape index: {}]
  %s11 = inlined_call_operand.vmem [shape: f32[1,128], index: 11, kind: input, shape index: {}]
  %s12 = inlined_call_operand.vmem [shape: f32[8,1], index: 12, kind: input, shape index: {}]
  %s13 = inlined_call_operand.vmem [shape: f32[1,128], index: 13, kind: input, shape index: {}]
  %s14 = inlined_call_operand.hbm [shape: f32[1,128], index: 14, kind: output, shape index: {}]
  %s15 = sld [smem:[#allocation0]]
  $region86: #{tpu_custom_call.1} parent=0
    _
  %s17 = ssub.s32 1, %s15
  %s18 = scalar_select 0, %s17, %s15
  $region1: #{tpu_custom_call.1} parent=0
    #allocation3 [shape = 'u8[16384]{0}', space=vmem, size = 0x4000, scoped, tag = 'input window, operand 3, single buffered']
    #allocation4 [shape = 's32[1]{0}', space=sflag, size = 0x4, scoped, tag = 'scoped memory for tpu_custom_call.1']
    #allocation5 [shape = 's32[1]{0}', space=sflag, size = 0x4, scoped, tag = 'scoped memory for tpu_custom_call.1']
    #allocation6 [shape = 'u8[512]{0}', space=vmem, size = 0x400, scoped, tag = 'input window, operand 4, single buffered']
    #allocation7 [shape = 's32[1]{0}', space=sflag, size = 0x4, scoped, tag = 'scoped memory for tpu_custom_call.1']
    #allocation8 [shape = 'u8[512]{0}', space=vmem, size = 0x400, scoped, tag = 'input window, operand 5, single buffered']
    #allocation9 [shape = 'u8[512]{0}', space=vmem, size = 0x400, scoped, tag = 'output window, operand 0, single buffered']
    %19 = vsyncpa [#allocation4], 0
    %20 = vsyncpa [#allocation7], 0
    %21 = vsyncpa [#allocation5], 0
    // Predicated region
    $region2: #{tpu_custom_call.1} parent=1 // pred_check
      _
    $region3: #{tpu_custom_call.1} parent=1 // pred_check_branch
      %23 = sbr.rel (0) target = $region5
    $region4: #{tpu_custom_call.1} parent=1 // pred_region
      _
    $region5: #{tpu_custom_call.1} parent=1 // pred_fallthru
      _
    // Predicated region
    $region6: #{tpu_custom_call.1} parent=1 // pred_check
      _
    $region7: #{tpu_custom_call.1} parent=1 // pred_check_branch
      %25 = sbr.rel (0) target = $region9
    $region8: #{tpu_custom_call.1} parent=1 // pred_region
      _
    $region9: #{tpu_custom_call.1} parent=1 // pred_fallthru
      _
    // Predicated region
    $region10: #{tpu_custom_call.1} parent=1 // pred_check
      _
    $region11: #{tpu_custom_call.1} parent=1 // pred_check_branch
      %27 = sbr.rel (0) target = $region13
    $region12: #{tpu_custom_call.1} parent=1 // pred_region
      _
    $region13: #{tpu_custom_call.1} parent=1 // pred_fallthru
      _
    // Predicated region
    $region14: #{tpu_custom_call.1} parent=1 // pred_check
      _
    $region15: #{tpu_custom_call.1} parent=1 // pred_check_branch
      %29 = sbr.rel (0) target = $region17
    $region16: #{tpu_custom_call.1} parent=1 // pred_region
      %s31 = ssub.s32 512, 512
      %32 = vsyncadd [#allocation4], %s31
      %s33 = sshll.u32 [#allocation3], 4
      %s34 = int_to_ptr.vmem [resolvable:$true] %s33
      %39 = dma.hbm_to_vmem [thread:$0]  %s3, 512, %s34, [#allocation4], 128, 128, 8
    $region17: #{tpu_custom_call.1} parent=1 // pred_fallthru
      _
    // Predicated region
    $region18: #{tpu_custom_call.1} parent=1 // pred_check
      _
    $region19: #{tpu_custom_call.1} parent=1 // pred_check_branch
      %41 = sbr.rel (0) target = $region21
    $region20: #{tpu_custom_call.1} parent=1 // pred_region
      %s43 = ssub.s32 16, 16
      %44 = vsyncadd [#allocation7], %s43
      %s46 = sshll.u32 [#allocation6], 4
      %s47 = int_to_ptr.vmem [resolvable:$true] %s46
      %49 = dma.hbm_to_vmem [thread:$0]  %s4, 16, %s47, [#allocation7]
    $region21: #{tpu_custom_call.1} parent=1 // pred_fallthru
      _
    // Predicated region
    $region22: #{tpu_custom_call.1} parent=1 // pred_check
      _
    $region23: #{tpu_custom_call.1} parent=1 // pred_check_branch
      %51 = sbr.rel (0) target = $region25
    $region24: #{tpu_custom_call.1} parent=1 // pred_region
      %s53 = ssub.s32 16, 16
      %54 = vsyncadd [#allocation7], %s53
      %s56 = sshll.u32 [#allocation8], 4
      %s57 = int_to_ptr.vmem [resolvable:$true] %s56
      %59 = dma.hbm_to_vmem [thread:$0]  %s5, 16, %s57, [#allocation7]
    $region25: #{tpu_custom_call.1} parent=1 // pred_fallthru
      _
    // Predicated region
    $region26: #{tpu_custom_call.1} parent=1 // pred_check
      _
    $region27: #{tpu_custom_call.1} parent=1 // pred_check_branch
      %61 = sbr.rel (0) target = $region29
    $region28: #{tpu_custom_call.1} parent=1 // pred_region
      _
    $region29: #{tpu_custom_call.1} parent=1 // pred_fallthru
      _
    // Predicated region
    $region30: #{tpu_custom_call.1} parent=1 // pred_check
      _
    $region31: #{tpu_custom_call.1} parent=1 // pred_check_branch
      %63 = sbr.rel (0) target = $region33
    $region32: #{tpu_custom_call.1} parent=1 // pred_region
      _
    $region33: #{tpu_custom_call.1} parent=1 // pred_fallthru
      _
    // Predicated region
    $region34: #{tpu_custom_call.1} parent=1 // pred_check
      _
    $region35: #{tpu_custom_call.1} parent=1 // pred_check_branch
      %65 = sbr.rel (0) target = $region37
    $region36: #{tpu_custom_call.1} parent=1 // pred_region
      _
    $region37: #{tpu_custom_call.1} parent=1 // pred_fallthru
      _
    // Predicated region
    $region38: #{tpu_custom_call.1} parent=1 // pred_check
      _
    $region39: #{tpu_custom_call.1} parent=1 // pred_check_branch
      %67 = sbr.rel (0) target = $region41
    $region40: #{tpu_custom_call.1} parent=1 // pred_region
      _
    $region41: #{tpu_custom_call.1} parent=1 // pred_fallthru
      _
    // Predicated region
    $region42: #{tpu_custom_call.1} parent=1 // pred_check
      _
    $region43: #{tpu_custom_call.1} parent=1 // pred_check_branch
      %69 = sbr.rel (0) target = $region45
    $region44: #{tpu_custom_call.1} parent=1 // pred_region
      _
    $region45: #{tpu_custom_call.1} parent=1 // pred_fallthru
      _
    // Predicated region
    $region46: #{tpu_custom_call.1} parent=1 // pred_check
      _
    $region47: #{tpu_custom_call.1} parent=1 // pred_check_branch
      %71 = sbr.rel (0) target = $region49
    $region48: #{tpu_custom_call.1} parent=1 // pred_region
      _
    $region49: #{tpu_custom_call.1} parent=1 // pred_fallthru
      _
    // Predicated region
    $region50: #{tpu_custom_call.1} parent=1 // pred_check
      _
    $region51: #{tpu_custom_call.1} parent=1 // pred_check_branch
      %73 = sbr.rel (0) target = $region53
    $region52: #{tpu_custom_call.1} parent=1 // pred_region
      _
    $region53: #{tpu_custom_call.1} parent=1 // pred_fallthru
      _
    // Predicated region
    $region54: #{tpu_custom_call.1} parent=1 // pred_check
      _
    $region55: #{tpu_custom_call.1} parent=1 // pred_check_branch
      %75 = sbr.rel (0) target = $region57
    $region56: #{tpu_custom_call.1} parent=1 // pred_region
      _
    $region57: #{tpu_custom_call.1} parent=1 // pred_fallthru
      _
    // Predicated region
    $region58: #{tpu_custom_call.1} parent=1 // pred_check
      _
    $region59: #{tpu_custom_call.1} parent=1 // pred_check_branch
      %77 = sbr.rel (0) target = $region61
    $region60: #{tpu_custom_call.1} parent=1 // pred_region
      %78 = dma.done [#allocation4], 512
    $region61: #{tpu_custom_call.1} parent=1 // pred_fallthru
      _
    // Predicated region
    $region62: #{tpu_custom_call.1} parent=1 // pred_check
      _
    $region63: #{tpu_custom_call.1} parent=1 // pred_check_branch
      %80 = sbr.rel (0) target = $region65
    $region64: #{tpu_custom_call.1} parent=1 // pred_region
      %81 = dma.done [#allocation7], 16
    $region65: #{tpu_custom_call.1} parent=1 // pred_fallthru
      _
    // Predicated region
    $region66: #{tpu_custom_call.1} parent=1 // pred_check
      _
    $region67: #{tpu_custom_call.1} parent=1 // pred_check_branch
      %83 = sbr.rel (0) target = $region69
    $region68: #{tpu_custom_call.1} parent=1 // pred_region
      %84 = dma.done [#allocation7], 16
    $region69: #{tpu_custom_call.1} parent=1 // pred_fallthru
      _
    %p85 = scmp.eq.s32.totalorder 0, 0
    // Predicated region
    $region70: #{tpu_custom_call.1} parent=1 // pred_check
      %p86 = pneg %p85
    $region71: #{tpu_custom_call.1} parent=1 // pred_check_branch
      %88 = sbr.rel (%p86) target = $region73
    $region72: #{tpu_custom_call.1} parent=1 // pred_region
      %vm89 = vcmask 7168
      %90 = vst.msk [vmem:[#allocation2] sm:$0xff] %vm89, 0.0
    $region73: #{tpu_custom_call.1} parent=1 // pred_fallthru
      _
    %v91 = vld [vmem:[%s1] sm:$0xff]
    %v92 = vld [vmem:[%s0] sm:$0xff]
    %v93 = vld [vmem:[%s7] sm:$0xff]
    %v94 = vld [vmem:[%s2] sm:$0xff]
    %v95 = vld [vmem:[%s2 + $0x8] sm:$0xff]
    %v96 = vld [vmem:[%s2 + $0x10] sm:$0xff]
    %v97 = vld [vmem:[%s2 + $0x18] sm:$0xff]
    %vm98 = vcmask 261120
    %v100 = vsel %vm98, %v91, 0
    %102 = vmatprep.subr.mxu0 0.0
    %103 = vmatpush1.msra.mxu0 0.0
    %104 = vmatprep.subr.mxu0 0.0
    %105 = vmatpush1.msra.mxu0 0.0
    %106 = vmatprep.subr.mxu0 0.0
    %107 = vmatpush1.msra.mxu0 0.0
    %108 = vmatprep.subr.mxu0 0.0
    %109 = vmatpush1.msra.mxu0 0.0
    %110 = vmatprep.subr.mxu0 0.0
    %111 = vmatpush1.msra.mxu0 0.0
    %112 = vmatprep.subr.mxu0 0.0
    %113 = vmatpush1.msra.mxu0 0.0
    %114 = vmatprep.subr.mxu0 0.0
    %115 = vmatpush1.msra.mxu0 0.0
    %116 = vmatprep.subr.mxu0 0.0
    %117 = vmatpush1.msra.mxu0 0.0
    %118 = vmatprep.subr.mxu0 0.0
    %119 = vmatpush1.msra.mxu0 0.0
    %120 = vmatprep.subr.mxu0 0.0
    %121 = vmatpush1.msra.mxu0 0.0
    %122 = vmatprep.subr.mxu0 0.0
    %123 = vmatpush1.msra.mxu0 0.0
    %124 = vmatprep.subr.mxu0 0.0
    %125 = vmatpush1.msra.mxu0 0.0
    %126 = vmatprep.subr.mxu0 0.0
    %127 = vmatpush1.msra.mxu0 %v97
    %128 = vmatprep.subr.mxu0 0.0
    %129 = vmatpush1.msra.mxu0 %v96
    %130 = vmatprep.subr.mxu0 0.0
    %131 = vmatpush1.msra.mxu0 %v95
    %132 = vmatprep.subr.mxu0 0.0
    %133 = vmatpush1.msra.mxu0 %v94
    %134 = vmatprep.subr.mxu0 0.0
    %135 = vmatpush2.msra.mxu0 0.0
    %136 = vmatprep.subr.mxu0 0.0
    %137 = vmatpush2.msra.mxu0 0.0
    %138 = vmatprep.subr.mxu0 0.0
    %139 = vmatpush2.msra.mxu0 0.0
    %140 = vmatprep.subr.mxu0 0.0
    %141 = vmatpush2.msra.mxu0 0.0
    %142 = vmatprep.subr.mxu0 0.0
    %143 = vmatpush2.msra.mxu0 0.0
    %144 = vmatprep.subr.mxu0 0.0
    %145 = vmatpush2.msra.mxu0 0.0
    %146 = vmatprep.subr.mxu0 0.0
    %147 = vmatpush2.msra.mxu0 0.0
    %148 = vmatprep.subr.mxu0 0.0
    %149 = vmatpush2.msra.mxu0 0.0
    %150 = vmatprep.subr.mxu0 0.0
    %151 = vmatpush2.msra.mxu0 0.0
    %152 = vmatprep.subr.mxu0 0.0
    %153 = vmatpush2.msra.mxu0 0.0
    %154 = vmatprep.subr.mxu0 0.0
    %155 = vmatpush2.msra.mxu0 0.0
    %156 = vmatprep.subr.mxu0 0.0
    %157 = vmatpush2.msra.mxu0 0.0
    %158 = vmatprep.subr.mxu0 0.0
    %159 = vmatpush2.msra.mxu0 0.0
    %160 = vmatprep.subr.mxu0 0.0
    %161 = vmatpush2.msra.mxu0 0.0
    %162 = vmatprep.subr.mxu0 0.0
    %163 = vmatpush2.msra.mxu0 0.0
    %164 = vmatprep.subr.mxu0 0.0
    %165 = vmatpush2.msra.mxu0 0.0
    %166 = vmatprep.mubr.f32.mxu0 0.0
    %167 = vmatmul.mubr.f32.gmra.mxu0 %v100
    %v168 = vpop.f32.mrf.mxu0
    %v169 = vadd.f32 0.0, %v168
    %v170 = vpop.f32.mrf.mxu0
    %171 = vdwg.mxu0
    %v172 = vld [vmem:[#allocation6] sm:$0x1]
    %174 = vset.pattern.permute.xlu0 0
    %175 = vperm.xlu0 %174, %v92
    %v176 = vpop.permute.xlu0 %175
    %v179 = vlaneseq
    %v180 = vshrl.u32 %v179, 7
    %v181 = vsub.s32 0, %v180
    %v182 = vrot.slane %v172, %v181
    %v184 = vadd.f32 %v176, %v182
    %v185 = vmul.f32 %v169, 2.0
    %v186 = vsub.f32 %v184, %v185
    %v187 = vmax.f32 %v186, 1e-12
    %v188 = vmul.f32 %v187, 0.01
    %v189 = vadd.f32 %v188, 1.0
    %v190 = vrcp.pop %v189
    %v191 = vmul.f32 %v189, %v190
    %v192 = vsub.f32 2.0, %v191
    %v193 = vmul.f32 %v190, %v192
    %v194 = vmul.f32 %v193, %v193
    %v195 = vmul.f32 %v194, %v194
    %v196 = vmul.f32 %v193, %v195
    %v197 = vmul.f32 %v195, %v195
    %v198 = vmul.f32 %v197, %v197
    %v199 = vmul.f32 %v198, %v198
    %v200 = vmul.f32 %v196, %v199
    %v201 = vmul.f32 %v199, %v199
    %v202 = vmul.f32 %v200, %v201
    %v203 = vmul.f32 %v202, 0.99450815
    %v204 = vld [vmem:[%s9] sm:$0x3]
    %206 = vset.pattern.permute.xlu0 0
    %207 = vperm.xlu0 %206, %v93
    %v208 = vpop.permute.xlu0 %207
    %v210 = vlaneseq
    %v211 = vshrl.u32 %v210, 7
    %v212 = vsub.s32 0, %v211
    %v213 = vrot.slane %v204, %v212
    %v214 = vsub.f32 %v208, %v213
    %v215 = vmul.f32 %v214, %v214
    %216 = vset.pattern.permute.xlu0 1
    %217 = vperm.xlu0 %216, %v93
    %v218 = vpop.permute.xlu0 %217
    %v220 = vlaneseq
    %v221 = vshrl.u32 %v220, 7
    %v222 = vsub.s32 1, %v221
    %v223 = vrot.slane %v204, %v222
    %v224 = vsub.f32 %v218, %v223
    %v225 = vmul.f32 %v224, %v224
    %v226 = vadd.f32 %v215, %v225
    %v227 = vmax.f32 %v226, 1e-12
    %v228 = vadd.f32 %v227, 1.0
    %v229 = vrcp.pop %v228
    %v230 = vmul.f32 %v228, %v229
    %v231 = vsub.f32 2.0, %v230
    %v232 = vmul.f32 %v229, %v231
    %v233 = vmul.f32 %v232, %v232
    %v234 = vmul.f32 %v233, 0.63629705
    %v235 = vadd.f32 %v234, 1e-05
    %v236 = vlog2.pop %v235
    %v237 = vmul.f32 %v236, 0.6931472
    %v238 = vsub.f32 1.0, %v234
    %v239 = vadd.f32 %v238, 1e-05
    %v240 = vlog2.pop %v239
    %v241 = vmul.f32 %v240, 0.6931472
    %v242 = vsub.f32 %v237, %v241
    %v243 = vmul.f32 %v203, %v242
    %v244 = vadd.f32 %v243, %v241
    %v245 = vsub.f32 0.0, %v244
    %v246 = vld [vmem:[%s13] sm:$0x1]
    %v248 = vlaneseq
    %v249 = vshrl.u32 %v248, 7
    %v250 = vsub.s32 0, %v249
    %v251 = vrot.slane %v246, %v250
    %v253 = vmul.f32 %v245, %v251
    %254 = vadd.xlane.f32.xlu0 %v253
    %v255 = vpop.xlane.xlu0 %254
    %v256 = vld [vmem:[%s12] sm:$0xff]
    %v257 = vmul.f32 %v255, %v256
    %v258 = vld [vmem:[#allocation2] sm:$0xff]
    %v259 = vadd.f32 %v258, %v257
    %vm260 = vcmask 7168
    %261 = vst.msk [vmem:[#allocation2] sm:$0xff] %vm260, %v259
    %v262 = vld [vmem:[#allocation3] sm:$0xff]
    %v263 = vld [vmem:[#allocation3 + $0x8] sm:$0xff]
    %v264 = vld [vmem:[#allocation3 + $0x10] sm:$0xff]
    %v265 = vld [vmem:[#allocation3 + $0x18] sm:$0xff]
    %266 = vmatprep.subr.mxu0 0.0
    %267 = vmatpush1.msra.mxu0 0.0
    %268 = vmatprep.subr.mxu0 0.0
    %269 = vmatpush1.msra.mxu0 0.0
    %270 = vmatprep.subr.mxu0 0.0
    %271 = vmatpush1.msra.mxu0 0.0
    %272 = vmatprep.subr.mxu0 0.0
    %273 = vmatpush1.msra.mxu0 0.0
    %274 = vmatprep.subr.mxu0 0.0
    %275 = vmatpush1.msra.mxu0 0.0
    %276 = vmatprep.subr.mxu0 0.0
    %277 = vmatpush1.msra.mxu0 0.0
    %278 = vmatprep.subr.mxu0 0.0
    %279 = vmatpush1.msra.mxu0 0.0
    %280 = vmatprep.subr.mxu0 0.0
    %281 = vmatpush1.msra.mxu0 0.0
    %282 = vmatprep.subr.mxu0 0.0
    %283 = vmatpush1.msra.mxu0 0.0
    %284 = vmatprep.subr.mxu0 0.0
    %285 = vmatpush1.msra.mxu0 0.0
    %286 = vmatprep.subr.mxu0 0.0
    %287 = vmatpush1.msra.mxu0 0.0
    %288 = vmatprep.subr.mxu0 0.0
    %289 = vmatpush1.msra.mxu0 0.0
    %290 = vmatprep.subr.mxu0 0.0
    %291 = vmatpush1.msra.mxu0 %v265
    %292 = vmatprep.subr.mxu0 0.0
    %293 = vmatpush1.msra.mxu0 %v264
    %294 = vmatprep.subr.mxu0 0.0
    %295 = vmatpush1.msra.mxu0 %v263
    %296 = vmatprep.subr.mxu0 0.0
    %297 = vmatpush1.msra.mxu0 %v262
    %298 = vmatprep.subr.mxu0 0.0
    %299 = vmatpush2.msra.mxu0 0.0
    %300 = vmatprep.subr.mxu0 0.0
    %301 = vmatpush2.msra.mxu0 0.0
    %302 = vmatprep.subr.mxu0 0.0
    %303 = vmatpush2.msra.mxu0 0.0
    %304 = vmatprep.subr.mxu0 0.0
    %305 = vmatpush2.msra.mxu0 0.0
    %306 = vmatprep.subr.mxu0 0.0
    %307 = vmatpush2.msra.mxu0 0.0
    %308 = vmatprep.subr.mxu0 0.0
    %309 = vmatpush2.msra.mxu0 0.0
    %310 = vmatprep.subr.mxu0 0.0
    %311 = vmatpush2.msra.mxu0 0.0
    %312 = vmatprep.subr.mxu0 0.0
    %313 = vmatpush2.msra.mxu0 0.0
    %314 = vmatprep.subr.mxu0 0.0
    %315 = vmatpush2.msra.mxu0 0.0
    %316 = vmatprep.subr.mxu0 0.0
    %317 = vmatpush2.msra.mxu0 0.0
    %318 = vmatprep.subr.mxu0 0.0
    %319 = vmatpush2.msra.mxu0 0.0
    %320 = vmatprep.subr.mxu0 0.0
    %321 = vmatpush2.msra.mxu0 0.0
    %322 = vmatprep.subr.mxu0 0.0
    %323 = vmatpush2.msra.mxu0 0.0
    %324 = vmatprep.subr.mxu0 0.0
    %325 = vmatpush2.msra.mxu0 0.0
    %326 = vmatprep.subr.mxu0 0.0
    %327 = vmatpush2.msra.mxu0 0.0
    %328 = vmatprep.subr.mxu0 0.0
    %329 = vmatpush2.msra.mxu0 0.0
    %330 = vmatprep.mubr.f32.mxu0 0.0
    %331 = vmatmul.mubr.f32.gmra.mxu0 %v100
    %v332 = vpop.f32.mrf.mxu0
    %v333 = vadd.f32 0.0, %v332
    %v334 = vpop.f32.mrf.mxu0
    %335 = vdwg.mxu0
    %v336 = vld [vmem:[#allocation8] sm:$0x1]
    %v338 = vlaneseq
    %v339 = vshrl.u32 %v338, 7
    %v340 = vsub.s32 0, %v339
    %v341 = vrot.slane %v336, %v340
    %v343 = vadd.f32 %v176, %v341
    %v344 = vmul.f32 %v333, 2.0
    %v345 = vsub.f32 %v343, %v344
    %v346 = vmax.f32 %v345, 1e-12
    %v347 = vmul.f32 %v346, 0.01
    %v348 = vadd.f32 %v347, 1.0
    %v349 = vrcp.pop %v348
    %v350 = vmul.f32 %v348, %v349
    %v351 = vsub.f32 2.0, %v350
    %v352 = vmul.f32 %v349, %v351
    %v353 = vmul.f32 %v352, %v352
    %v354 = vmul.f32 %v353, %v353
    %v355 = vmul.f32 %v352, %v354
    %v356 = vmul.f32 %v354, %v354
    %v357 = vmul.f32 %v356, %v356
    %v358 = vmul.f32 %v357, %v357
    %v359 = vmul.f32 %v355, %v358
    %v360 = vmul.f32 %v358, %v358
    %v361 = vmul.f32 %v359, %v360
    %v362 = vmul.f32 %v361, 0.99450815
    %v363 = vld [vmem:[%s8] sm:$0x3]
    %v364 = vlaneseq
    %v365 = vshrl.u32 %v364, 7
    %v366 = vsub.s32 0, %v365
    %v367 = vrot.slane %v363, %v366
    %v368 = vsub.f32 %v208, %v367
    %v369 = vmul.f32 %v368, %v368
    %v370 = vlaneseq
    %v371 = vshrl.u32 %v370, 7
    %v372 = vsub.s32 1, %v371
    %v373 = vrot.slane %v363, %v372
    %v374 = vsub.f32 %v218, %v373
    %v375 = vmul.f32 %v374, %v374
    %v376 = vadd.f32 %v369, %v375
    %v377 = vmax.f32 %v376, 1e-12
    %v378 = vadd.f32 %v377, 1.0
    %v379 = vrcp.pop %v378
    %v380 = vmul.f32 %v378, %v379
    %v381 = vsub.f32 2.0, %v380
    %v382 = vmul.f32 %v379, %v381
    %v383 = vmul.f32 %v382, %v382
    %v384 = vmul.f32 %v383, 0.63629705
    %v385 = vadd.f32 %v384, 1e-05
    %v386 = vlog2.pop %v385
    %v387 = vmul.f32 %v386, 0.6931472
    %v388 = vsub.f32 1.0, %v384
    %v389 = vadd.f32 %v388, 1e-05
    %v390 = vlog2.pop %v389
    %v391 = vmul.f32 %v390, 0.6931472
    %v392 = vsub.f32 %v387, %v391
    %v393 = vmul.f32 %v362, %v392
    %v394 = vadd.f32 %v393, %v391
    %v395 = vsub.f32 0.0, %v394
    %v396 = vld [vmem:[%s13] sm:$0x1]
    %v398 = vlaneseq
    %v399 = vshrl.u32 %v398, 7
    %v400 = vsub.s32 0, %v399
    %v401 = vrot.slane %v396, %v400
    %v403 = vmul.f32 %v395, %v401
    %404 = vadd.xlane.f32.xlu0 %v403
    %v405 = vpop.xlane.xlu0 %404
    %v406 = vld [vmem:[%s12] sm:$0xff]
    %v407 = vmul.f32 %v405, %v406
    %v408 = vld [vmem:[#allocation2] sm:$0xff]
    %v409 = vadd.f32 %v408, %v407
    %410 = vst.msk [vmem:[#allocation2] sm:$0xff] %vm260, %v409
    // Predicated region
    $region74: #{tpu_custom_call.1} parent=1 // pred_check
      %p411 = pneg %p85
    $region75: #{tpu_custom_call.1} parent=1 // pred_check_branch
      %413 = sbr.rel (%p411) target = $region77
    $region76: #{tpu_custom_call.1} parent=1 // pred_region
      %v414 = vld [vmem:[#allocation2] sm:$0xff]
      %v415 = vsel %vm260, %v414, 0.0
      %416 = vadd.xlane.f32.xlu0 %v415
      %v417 = vpop.xlane.xlu0 %416
      %v418 = vrot.slane %v417, 4
      %v419 = vadd.f32 %v417, %v418
      %v420 = vrot.slane %v419, 2
      %v421 = vadd.f32 %v419, %v420
      %v422 = vrot.slane %v421, 1
      %v423 = vadd.f32 %v421, %v422
      %s424 = vtos %v423
      %v425 = vstv %s424
      %v426 = vadd.f32 %v425, 0.0
      %427 = vst [vmem:[#allocation9] sm:$0x1] %v426
    $region77: #{tpu_custom_call.1} parent=1 // pred_fallthru
      _
    // Predicated region
    $region78: #{tpu_custom_call.1} parent=1 // pred_check
      _
    $region79: #{tpu_custom_call.1} parent=1 // pred_check_branch
      %429 = sbr.rel (0) target = $region81
    $region80: #{tpu_custom_call.1} parent=1 // pred_region
      %s431 = ssub.s32 16, 16
      %432 = vsyncadd [#allocation5], %s431
      %s434 = sshll.u32 [#allocation9], 4
      %s435 = int_to_ptr.vmem [resolvable:$true] %s434
      %437 = dma.vmem_to_hbm [thread:$0]  %s435, 16, %s14, [#allocation5]
    $region81: #{tpu_custom_call.1} parent=1 // pred_fallthru
      _
    // Predicated region
    $region82: #{tpu_custom_call.1} parent=1 // pred_check
      _
    $region83: #{tpu_custom_call.1} parent=1 // pred_check_branch
      %439 = sbr.rel (0) target = $region85
    $region84: #{tpu_custom_call.1} parent=1 // pred_region
      %440 = dma.done [#allocation5], 16
    $region85: #{tpu_custom_call.1} parent=1 // pred_fallthru
      _
    %441 = vsyncpa [#allocation4], 1
    %442 = vsyncpa [#allocation7], 1
    %443 = vsyncpa [#allocation5], 1

</llo_original>
